<compile_context>
chip_gen: v6e
topology: v6e:2x2x1
jax: 0.10.0
libtpu: 0.0.40
codegen_flags: <defaults>
</compile_context>

<pallas_src>
import functools

import jax
import jax.numpy as jnp
from jax.experimental import pallas as pl
from jax.experimental.pallas import tpu as pltpu

_NEG = -1e30                       # finite "-inf" sentinel (avoids inf-inf NaNs)
_VMEM_LIMIT = 48 * 1024 * 1024     # v7x: 64 MiB/TC physical -> keep headroom


def _round_up(a, b):
    return (a + b - 1) // b * b


# --------------------- fc (+ fused attention logits) kernel -----------------

def _fc_attn_kernel(x_ref, w_ref, a_ref, *out_refs, want_z):
    # x (tm, K) bf16, w (K, HD) bf16, a (HD, 128) bf16 (attn_l/attn_r embedded).
    z = jnp.dot(x_ref[...], w_ref[...], preferred_element_type=jnp.float32)
    zb = z.astype(jnp.bfloat16)
    if want_z:
        z_ref, att_ref = out_refs
        z_ref[...] = zb                       # bf16 activations in HBM
    else:
        (att_ref,) = out_refs                 # dst-only path: er needed, z not
    # Per-head logits fused into the fc pass: cols 0..H-1 = a_l.z, H..2H-1 =
    # a_r.z, rest zero.  128-lane output -> full (unmasked) stores.
    att_ref[...] = jnp.dot(zb, a_ref[...], preferred_element_type=jnp.float32)


def fc_attn_pallas(x, w_bf16, a_bf16, *, want_z=True, tm_max=512):
    """z = x @ W_fc (bf16) plus fused per-head attention logits (f32)."""
    x = x.astype(jnp.bfloat16)                # no f32 activation copies in HBM
    M, K = x.shape
    HD = w_bf16.shape[1]
    tm = M if M <= tm_max else tm_max         # full-dim block keeps tiling legal
    kernel = functools.partial(_fc_attn_kernel, want_z=want_z)
    if want_z:
        out_shape = (jax.ShapeDtypeStruct((M, HD), jnp.bfloat16),
                     jax.ShapeDtypeStruct((M, 128), jnp.float32))
        out_specs = (pl.BlockSpec((tm, HD), lambda i: (i, 0)),
                     pl.BlockSpec((tm, 128), lambda i: (i, 0)))
    else:
        out_shape = jax.ShapeDtypeStruct((M, 128), jnp.float32)
        out_specs = pl.BlockSpec((tm, 128), lambda i: (i, 0))
    res = pl.pallas_call(
        kernel,
        out_shape=out_shape,
        grid=(pl.cdiv(M, tm),),
        in_specs=[pl.BlockSpec((tm, K), lambda i: (i, 0)),
                  pl.BlockSpec((K, HD), lambda i: (0, 0)),
                  pl.BlockSpec((HD, 128), lambda i: (0, 0))],
        out_specs=out_specs,
        compiler_params=pltpu.CompilerParams(
            dimension_semantics=("parallel",), vmem_limit_bytes=_VMEM_LIMIT),
    )(x, w_bf16, a_bf16)
    if want_z:
        return res[0], res[1]
    return None, res


# --------------------------- final classifier kernel ------------------------

def _linear_kernel(x_ref, w_ref, b_ref, o_ref):
    o_ref[...] = (jnp.dot(x_ref[...], w_ref[...],
                          preferred_element_type=jnp.float32) + b_ref[...])


def linear_pallas(x, w, b, tm_max=512):
    """y = x @ w + b (bf16 MXU inputs, f32 accumulation, lane-dense N>=128)."""
    x = x.astype(jnp.bfloat16)
    M, K = x.shape
    N = w.shape[1]
    Np = 128 if N < 128 else N                # lane-dense stores for tiny N
    wp = jnp.zeros((K, Np), jnp.bfloat16).at[:, :N].set(w.astype(jnp.bfloat16))
    bp = jnp.zeros((1, Np), jnp.float32).at[0, :N].set(b.astype(jnp.float32))
    tm = M if M <= tm_max else tm_max
    out = pl.pallas_call(
        _linear_kernel,
        out_shape=jax.ShapeDtypeStruct((M, Np), jnp.float32),
        grid=(pl.cdiv(M, tm),),
        in_specs=[pl.BlockSpec((tm, K), lambda i: (i, 0)),
                  pl.BlockSpec((K, Np), lambda i: (0, 0)),
                  pl.BlockSpec((1, Np), lambda i: (0, 0))],
        out_specs=pl.BlockSpec((tm, Np), lambda i: (i, 0)),
        compiler_params=pltpu.CompilerParams(
            dimension_semantics=("parallel",), vmem_limit_bytes=_VMEM_LIMIT),
    )(x, wp, bp)
    return out if Np == N else out[:, :N]


# -------------------------------- GAT kernel --------------------------------

def _gat_kernel(cols_ref, occ_ref, er_ref, el_ref, adj_ref, fs_ref, bias_ref,
                *rest, n_heads, head_dim, ns_tiles, has_accin, apply_relu):
    """One (dst-tile, src-tile) step of masked multi-head GAT attention.

    Grid = (dst tiles [parallel], src tiles [arbitrary reduction]).  Online
    (flash-style) softmax over src tiles with running max / denom / f32 acc in
    VMEM scratch.  All-zero adjacency tiles are skipped entirely (their DMA is
    also elided by the data-dependent index maps).  The lane-dense (td, H*D)
    output block is written once at the last src step with GATConv bias, the
    per-dst-type edge-type sum and the optional inter-layer ReLU fused in.
    """
    if has_accin:
        accin_ref, o_ref, m_scr, l_scr, acc_scr = rest
    else:
        accin_ref = None
        o_ref, m_scr, l_scr, acc_scr = rest

    i = pl.program_id(0)
    j = pl.program_id(1)

    @pl.when(j == 0)
    def _init():
        m_scr[...] = jnp.full_like(m_scr, _NEG)
        l_scr[...] = jnp.zeros_like(l_scr)
        acc_scr[...] = jnp.zeros_like(acc_scr)

    @pl.when(occ_ref[i * ns_tiles + j] != 0)   # block-sparsity: skip empty tiles
    def _compute():
        adj = adj_ref[...]                     # (td, ts) int8 {0,1}, host-padded
        edge = adj > 0
        mask_f = edge.astype(jnp.float32)
        fs = fs_ref[...]                       # (ts, H*D) bf16, zero-padded rows
        # Static unroll over heads (H small).  NOTE: for D % 128 != 0 the column
        # slices below are not lane-tile aligned; typical IGBH configs use D=128.
        for h in range(n_heads):
            er_h = er_ref[:, h:h + 1]          # (td, 1) dst logits (lane-dense HBM)
            el_h = el_ref[h:h + 1, :]          # (1, ts) src logits
            e = er_h + el_h                    # (td, ts)
            e = jnp.maximum(e, 0.2 * e)        # LeakyReLU(0.2) as a single max
            e = jnp.where(edge, e, _NEG)       # keep masked entries out of the max
            m_prev = m_scr[h]                  # (td, 1)
            m_new = jnp.maximum(m_prev, jnp.max(e, axis=-1, keepdims=True))
            corr = jnp.exp(m_prev - m_new)
            p = jnp.exp(e - m_new) * mask_f    # exact zeros on non-edges / padding
            l_scr[h] = corr * l_scr[h] + jnp.sum(p, axis=-1, keepdims=True)
            m_scr[h] = m_new
            lo, hi = h * head_dim, (h + 1) * head_dim
            acc_scr[:, lo:hi] = corr * acc_scr[:, lo:hi] + jnp.dot(
                p.astype(jnp.bfloat16), fs[:, lo:hi],
                preferred_element_type=jnp.float32)

    @pl.when(j == pl.num_programs(1) - 1)
    def _finalize():
        for h in range(n_heads):
            lo, hi = h * head_dim, (h + 1) * head_dim
            # Softmax denom >= 1 whenever a dst node has >=1 in-edge; rows with
            # zero in-degree have acc == 0, so clamping at 1.0 keeps them exactly
            # zero (matching DGL).
            inv = pl.reciprocal(jnp.maximum(l_scr[h], 1.0), approx=True)
            acc_scr[:, lo:hi] = acc_scr[:, lo:hi] * inv
        res = acc_scr[...] + bias_ref[...]
        if has_accin:
            res = res + accin_ref[...]         # HeteroGraphConv 'sum' over etypes
        if apply_relu:
            res = jnp.maximum(res, 0.0)        # inter-layer ReLU fused in writeback
        o_ref[...] = res.astype(o_ref.dtype)


def gat_attention(er, el, adj, fs, bias, acc_prev, *, n_heads, head_dim,
                  apply_relu, out_dtype, td_max=512, ts_max=512):
    """Masked multi-head edge softmax + aggregation, tiled over (dst, src).

    er (Nd, H) f32, el (H, Ns) f32, adj (Nd, Ns) int8, fs (Ns, H*D) bf16,
    bias (1, H*D) f32, acc_prev None or (Nd_pad, H*D) f32 running etype sum.
    Returns (Nd_pad, H*D) in out_dtype; caller slices off the dst padding.
    """
    H, HD = n_heads, n_heads * head_dim
    Nd, Ns = adj.shape

    td = min(td_max, _round_up(Nd, 8))
    ts = min(ts_max, _round_up(Ns, 128))
    nd_pad = _round_up(Nd, td)
    ns_pad = _round_up(Ns, ts)
    nd_t, ns_t = nd_pad // td, ns_pad // ts

    # Host zero-padding to tile multiples: the in-kernel ragged iota masks
    # compile away; masking relies on adj == 0 / fs == 0 in the padding.
    adj_p = jnp.pad(adj.astype(jnp.int8), ((0, nd_pad - Nd), (0, ns_pad - Ns)))
    fs_p = jnp.pad(fs.astype(jnp.bfloat16), ((0, ns_pad - Ns), (0, 0)))
    el_p = jnp.pad(el.astype(jnp.float32), ((0, 0), (0, ns_pad - Ns)))
    er_p = jnp.pad(er.astype(jnp.float32), ((0, nd_pad - Nd), (0, 0)))

    # Per-(dst-tile, src-tile) occupancy (block sparsity of the adjacency).
    # TODO(synk): for real sampled IGBH blocks build this metadata once per
    # minibatch from the CSR structure instead of scanning the dense mask.
    occ = jnp.any(adj_p.reshape(nd_t, td, ns_t, ts) != 0, axis=(1, 3))
    jidx = jnp.broadcast_to(jnp.arange(ns_t, dtype=jnp.int32), (nd_t, ns_t))
    # Empty tiles repeat the last non-empty tile index -> unchanged block index
    # in the data index_maps -> Pallas elides their DMA; compute is pl.when-gated.
    cols = jnp.maximum(jax.lax.cummax(jnp.where(occ, jidx, -1), axis=1), 0)
    cols_flat = cols.reshape(-1).astype(jnp.int32)
    occ_flat = occ.reshape(-1).astype(jnp.int32)

    has_accin = acc_prev is not None
    inputs = [er_p, el_p, adj_p, fs_p, bias.astype(jnp.float32)]
    in_specs = [
        pl.BlockSpec((td, H), lambda i, j, c, o: (i, 0)),              # er
        pl.BlockSpec((H, ts), lambda i, j, c, o: (0, c[i * ns_t + j])),  # el
        pl.BlockSpec((td, ts), lambda i, j, c, o: (i, c[i * ns_t + j])),  # adj
        pl.BlockSpec((ts, HD), lambda i, j, c, o: (c[i * ns_t + j], 0)),  # fs
        pl.BlockSpec((1, HD), lambda i, j, c, o: (0, 0)),              # bias
    ]
    if has_accin:
        inputs.append(acc_prev.astype(jnp.float32))
        in_specs.append(pl.BlockSpec((td, HD), lambda i, j, c, o: (i, 0)))

    kernel = functools.partial(
        _gat_kernel, n_heads=H, head_dim=head_dim, ns_tiles=ns_t,
        has_accin=has_accin, apply_relu=apply_relu)

    return pl.pallas_call(
        kernel,
        out_shape=jax.ShapeDtypeStruct((nd_pad, HD), out_dtype),
        grid_spec=pltpu.PrefetchScalarGridSpec(
            num_scalar_prefetch=2,
            grid=(nd_t, ns_t),
            in_specs=in_specs,
            out_specs=pl.BlockSpec((td, HD), lambda i, j, c, o: (i, 0)),
            scratch_shapes=[
                pltpu.VMEM((H, td, 1), jnp.float32),   # running max
                pltpu.VMEM((H, td, 1), jnp.float32),   # running denom
                pltpu.VMEM((td, HD), jnp.float32),     # f32 output accumulator
            ]),
        compiler_params=pltpu.CompilerParams(
            dimension_semantics=("parallel", "arbitrary"),
            vmem_limit_bytes=_VMEM_LIMIT),
    )(cols_flat, occ_flat, *inputs)


# ------------------------------ model (glue) --------------------------------

def _attn_matrix(attn_l, attn_r):
    """Embed attn_l / attn_r into an (HD, 128) matrix so the fc kernel can emit
    per-head el (cols 0..H-1) and er (cols H..2H-1) logits in one lane-dense pass."""
    H, D = attn_l.shape
    HD = H * D
    assert 2 * H <= 128
    rows = jnp.arange(HD)
    heads = jnp.repeat(jnp.arange(H), D)
    a = jnp.zeros((HD, 128), jnp.float32)
    a = a.at[rows, heads].set(attn_l.reshape(-1))
    a = a.at[rows, H + heads].set(attn_r.reshape(-1))
    return a.astype(jnp.bfloat16)


def gatconv_forward(p, feat_src, feat_dst, adj, n_heads, acc_prev, apply_relu,
                    out_dtype):
    """One DGL-style GATConv (eval mode); output already flattened to (Nd_pad, H*D)."""
    HD = p["w_fc"].shape[1]
    H = n_heads
    D = HD // H
    w = p["w_fc"].astype(jnp.bfloat16)
    amat = _attn_matrix(p["attn_l"], p["attn_r"])
    # feat_drop is identity at eval; fc has bias=False and is shared src/dst.
    # Attention logits are fused into the fc kernel (no extra HBM pass over z).
    z_src, att_src = fc_attn_pallas(feat_src, w, amat)
    if feat_dst is feat_src:
        att_dst = att_src
    else:
        att_dst = fc_attn_pallas(feat_dst, w, amat, want_z=False)[1]
    el = att_src[:, :H].T            # (H, Ns)  lane-dense src logits
    er = att_dst[:, H:2 * H]         # (Nd, H)  lane-dense dst logits
    return gat_attention(er, el, adj, z_src, p["bias"].reshape(1, HD), acc_prev,
                         n_heads=H, head_dim=D, apply_relu=apply_relu,
                         out_dtype=out_dtype)


def hetero_layer(layer_params, block, feats, n_heads, apply_relu):
    """HeteroGraphConv with 'sum' aggregation over edge types per dst type.

    The per-dst-type sum, GATConv bias, head flatten and inter-layer ReLU are
    fused into the GAT kernel's writeback; the first edge type uses the variant
    without the accumulator input (saves one Nd*HD read per dst type).
    """
    by_dst = {}
    for (st, et, dt), adj in block:
        by_dst.setdefault(dt, []).append((st, et, adj))
    out = {}
    for dt, items in by_dst.items():
        nd = feats[dt].shape[0]
        acc = None
        for idx, (st, et, adj) in enumerate(items):
            last = idx == len(items) - 1
            acc = gatconv_forward(
                layer_params[et], feats[st], feats[dt], adj, n_heads,
                acc_prev=acc, apply_relu=apply_relu and last,
                out_dtype=jnp.bfloat16 if last else jnp.float32)
        out[dt] = acc[:nd]           # drop dst padding rows
    return out


def rgat_forward(params, blocks, x, n_heads):
    h = x
    num_layers = len(params["layers"])
    for l, (lp, block) in enumerate(zip(params["layers"], blocks)):
        # Heads are flattened to (N, H*D) inside the kernel; layer outputs are
        # emitted in bf16 so the next layer's fc streams half the bytes.
        h = hetero_layer(lp, block, h, n_heads,
                         apply_relu=(l != num_layers - 1))
        # TODO(synk): nn.Dropout(0.2) between layers omitted -- eval-mode identity.
    return linear_pallas(h["paper"], params["linear_w"], params["linear_b"])


def init_params(key, canonical_etypes, in_feats, h_feats, num_classes,
                num_layers, n_heads):
    D = h_feats // n_heads
    dims = [in_feats] + [h_feats] * (num_layers - 1)
    params = {"layers": []}
    for l in range(num_layers):
        lp = {}
        for (_st, et, _dt) in canonical_etypes:
            key, k1, k2, k3, k4 = jax.random.split(key, 5)
            lp[et] = {
                "w_fc":   0.1 * jax.random.normal(k1, (dims[l], n_heads * D), jnp.float32),
                "attn_l": 0.1 * jax.random.normal(k2, (n_heads, D), jnp.float32),
                "attn_r": 0.1 * jax.random.normal(k3, (n_heads, D), jnp.float32),
                "bias":   0.1 * jax.random.normal(k4, (n_heads * D,), jnp.float32),
            }
        params["layers"].append(lp)
    key, k1, k2 = jax.random.split(key, 3)
    params["linear_w"] = 0.1 * jax.random.normal(k1, (h_feats, num_classes), jnp.float32)
    params["linear_b"] = 0.1 * jax.random.normal(k2, (num_classes,), jnp.float32)
    return params


# --------------------------------- demo -------------------------------------

if __name__ == "__main__":
    in_feats, h_feats, num_classes = 32, 32, 8
    num_layers, n_heads = 2, 2
    n_paper, n_author = 16, 12
    num_nodes = {"paper": n_paper, "author": n_author}
    canonical_etypes = [
        ("paper", "cites", "paper"),
        ("author", "writes", "paper"),
        ("paper", "rev_writes", "author"),
    ]

    key = jax.random.PRNGKey(0)
    key, kp, ka = jax.random.split(key, 3)
    x = {
        "paper": jax.random.normal(kp, (n_paper, in_feats), jnp.float32),
        "author": jax.random.normal(ka, (n_author, in_feats), jnp.float32),
    }

    # Blocks: one dense {0,1} int8 adjacency mask A[dst, src] per edge type/layer.
    blocks = []
    for _l in range(num_layers):
        blk = []
        for (st, et, dt) in canonical_etypes:
            key, ke = jax.random.split(key)
            adj = (jax.random.uniform(ke, (num_nodes[dt], num_nodes[st]))
                   < 0.35).astype(jnp.int8)
            blk.append(((st, et, dt), adj))
        blocks.append(blk)

    params = init_params(jax.random.PRNGKey(1), canonical_etypes, in_feats,
                         h_feats, num_classes, num_layers, n_heads)

    out = rgat_forward(params, blocks, x, n_heads)
    out = jax.block_until_ready(out)
    assert out.shape == (n_paper, num_classes), out.shape
    assert bool(jnp.all(jnp.isfinite(out)))
    print("KERNEL_OK")
</pallas_src>

<mosaic_0001>
module attributes {stable_mosaic.version = 11 : i64} {
  func.func @_fc_attn_kernel(%arg0: i32, %arg1: memref<16x32xbf16, #tpu.memory_space<vmem>>, %arg2: memref<32x32xbf16, #tpu.memory_space<vmem>>, %arg3: memref<32x128xbf16, #tpu.memory_space<vmem>>, %arg4: memref<16x32xbf16, #tpu.memory_space<vmem>>, %arg5: memref<16x128xf32, #tpu.memory_space<vmem>>) attributes {dimension_semantics = [#tpu.dimension_semantics<parallel>], iteration_bounds = array<i64: 1>, scalar_prefetch = 0 : i64, scratch_operands = 0 : i64, tpu.core_type = #tpu.core_type<tc>, window_params = [{transform_indices = @transform_0, window_bounds = array<i64: 16, 32>}, {pipeline_mode = #tpu.pipeline_mode<synchronous>, transform_indices = @transform_1, window_bounds = array<i64: 32, 32>}, {pipeline_mode = #tpu.pipeline_mode<synchronous>, transform_indices = @transform_2, window_bounds = array<i64: 32, 128>}, {transform_indices = @transform_3, window_bounds = array<i64: 16, 32>}, {transform_indices = @transform_4, window_bounds = array<i64: 16, 128>}]} {
    %c0 = arith.constant 0 : index
    %c0_0 = arith.constant 0 : index
    %0 = vector.load %arg1[%c0, %c0_0] : memref<16x32xbf16, #tpu.memory_space<vmem>>, vector<16x32xbf16>
    %c0_1 = arith.constant 0 : index
    %c0_2 = arith.constant 0 : index
    %1 = vector.load %arg2[%c0_1, %c0_2] : memref<32x32xbf16, #tpu.memory_space<vmem>>, vector<32x32xbf16>
    %cst = arith.constant dense<0.000000e+00> : vector<16x32xf32>
    %2 = tpu.matmul %0, %1, %cst {dimension_numbers = #tpu.dot_dimension_numbers<[1], [0], [0], [1], [0, 0, 1, 1], [], []>} : vector<16x32xbf16>, vector<32x32xbf16>, vector<16x32xf32> -> vector<16x32xf32>
    %3 = arith.truncf %2 : vector<16x32xf32> to vector<16x32xbf16>
    %c0_3 = arith.constant 0 : index
    %c0_4 = arith.constant 0 : index
    %4 = vector.load %arg4[%c0_3, %c0_4] : memref<16x32xbf16, #tpu.memory_space<vmem>>, vector<16x32xbf16>
    tpu.vector_store %arg4[%c0_3, %c0_4], %3 {strides = array<i32>} : memref<16x32xbf16, #tpu.memory_space<vmem>>, vector<16x32xbf16>,
    %c0_5 = arith.constant 0 : index
    %c0_6 = arith.constant 0 : index
    %5 = vector.load %arg3[%c0_5, %c0_6] : memref<32x128xbf16, #tpu.memory_space<vmem>>, vector<32x128xbf16>
    %cst_7 = arith.constant dense<0.000000e+00> : vector<16x128xf32>
    %6 = tpu.matmul %3, %5, %cst_7 {dimension_numbers = #tpu.dot_dimension_numbers<[1], [0], [0], [1], [0, 0, 1, 1], [], []>} : vector<16x32xbf16>, vector<32x128xbf16>, vector<16x128xf32> -> vector<16x128xf32>
    %c0_8 = arith.constant 0 : index
    %c0_9 = arith.constant 0 : index
    %7 = vector.load %arg5[%c0_8, %c0_9] : memref<16x128xf32, #tpu.memory_space<vmem>>, vector<16x128xf32>
    tpu.vector_store %arg5[%c0_8, %c0_9], %6 {strides = array<i32>} : memref<16x128xf32, #tpu.memory_space<vmem>>, vector<16x128xf32>,
    return
  }
  func.func @transform_0(%arg0: i32) -> (i32, i32) {
    %c0_i32 = arith.constant 0 : i32
    %c0_i32_0 = arith.constant 0 : i32
    return %arg0, %c0_i32 : i32, i32
  }
  func.func @transform_1(%arg0: i32) -> (i32, i32) {
    %c0_i32 = arith.constant 0 : i32
    %c0_i32_0 = arith.constant 0 : i32
    %c0_i32_1 = arith.constant 0 : i32
    return %c0_i32, %c0_i32_0 : i32, i32
  }
  func.func @transform_2(%arg0: i32) -> (i32, i32) {
    %c0_i32 = arith.constant 0 : i32
    %c0_i32_0 = arith.constant 0 : i32
    %c0_i32_1 = arith.constant 0 : i32
    return %c0_i32, %c0_i32_0 : i32, i32
  }
  func.func @transform_3(%arg0: i32) -> (i32, i32) {
    %c0_i32 = arith.constant 0 : i32
    %c0_i32_0 = arith.constant 0 : i32
    return %arg0, %c0_i32 : i32, i32
  }
  func.func @transform_4(%arg0: i32) -> (i32, i32) {
    %c0_i32 = arith.constant 0 : i32
    %c0_i32_0 = arith.constant 0 : i32
    return %arg0, %c0_i32 : i32, i32
  }
}

</mosaic_0001>

<llo_original>
// kernel: tpu_custom_call.1
$region0: #{tpu_custom_call.1}
  #allocation0 [shape = 'u32[]', space=smem, size = 0x4, offset = 0x4, fixed_abs, tag = 'smem constant byte address 0x4 - core index']
  #allocation1 [shape = 'u32[144,128]{1,0:T(1,128)}', space=vmem, size = 0x12000, scoped, tag = 'internal scratch']
  %s0 = inlined_call_operand.hbm [shape: bf16[16,32], index: 0, kind: input, shape index: {}]
  %s1 = inlined_call_operand.hbm [shape: bf16[32,32], index: 1, kind: input, shape index: {}]
  %s2 = inlined_call_operand.hbm [shape: bf16[32,128], index: 2, kind: input, shape index: {}]
  %s3 = inlined_call_operand.hbm [shape: bf16[16,32], index: 3, kind: output, shape index: {0}]
  %s4 = inlined_call_operand.hbm [shape: f32[16,128], index: 4, kind: output, shape index: {1}]
  %5 = xla_tuple %s3, %s4
  %s6 = sld [smem:[#allocation0]]
  $region42: #{tpu_custom_call.1} parent=0
    _
  %s8 = ssub.s32 1, %s6
  %s9 = scalar_select 0, %s8, %s6
  $region1: #{tpu_custom_call.1} parent=0
    #allocation2 [shape = 'u8[4096]{0}', space=vmem, size = 0x1000, scoped, tag = 'input window, operand 0, single buffered']
    #allocation3 [shape = 's32[1]{0}', space=sflag, size = 0x4, scoped, tag = 'scoped memory for tpu_custom_call.1']
    #allocation4 [shape = 's32[1]{0}', space=sflag, size = 0x4, scoped, tag = 'scoped memory for tpu_custom_call.1']
    #allocation5 [shape = 'u8[8192]{0}', space=vmem, size = 0x2000, scoped, tag = 'input window, operand 1, single buffered']
    #allocation6 [shape = 's32[1]{0}', space=sflag, size = 0x4, scoped, tag = 'scoped memory for tpu_custom_call.1']
    #allocation7 [shape = 'u8[8192]{0}', space=vmem, size = 0x2000, scoped, tag = 'input window, operand 2, single buffered']
    #allocation8 [shape = 'u8[4096]{0}', space=vmem, size = 0x1000, scoped, tag = 'output window, operand 0, single buffered']
    #allocation9 [shape = 'u8[8192]{0}', space=vmem, size = 0x2000, scoped, tag = 'output window, operand 1, single buffered']
    #allocation10 [shape = 's32[1]{0}', space=sflag, size = 0x4, scoped, tag = 'scoped memory for tpu_custom_call.1']
    %10 = vsyncpa [#allocation3], 0
    %11 = vsyncpa [#allocation6], 0
    %12 = vsyncpa [#allocation4], 0
    %13 = vsyncpa [#allocation10], 0
    // Predicated region
    $region2: #{tpu_custom_call.1} parent=1 // pred_check
      _
    $region3: #{tpu_custom_call.1} parent=1 // pred_check_branch
      %15 = sbr.rel (0) target = $region5
    $region4: #{tpu_custom_call.1} parent=1 // pred_region
      %s17 = ssub.s32 128, 128
      %18 = vsyncadd [#allocation3], %s17
      %s19 = sshll.u32 [#allocation2], 4
      %s20 = int_to_ptr.vmem [resolvable:$true] %s19
      %25 = dma.hbm_to_vmem [thread:$0]  %s0, 128, %s20, [#allocation3], 64, 64, 4
    $region5: #{tpu_custom_call.1} parent=1 // pred_fallthru
      _
    // Predicated region
    $region6: #{tpu_custom_call.1} parent=1 // pred_check
      _
    $region7: #{tpu_custom_call.1} parent=1 // pred_check_branch
      %27 = sbr.rel (0) target = $region9
    $region8: #{tpu_custom_call.1} parent=1 // pred_region
      %s29 = ssub.s32 256, 256
      %30 = vsyncadd [#allocation6], %s29
      %s31 = sshll.u32 [#allocation5], 4
      %s32 = int_to_ptr.vmem [resolvable:$true] %s31
      %37 = dma.hbm_to_vmem [thread:$0]  %s1, 256, %s32, [#allocation6], 64, 64, 4
    $region9: #{tpu_custom_call.1} parent=1 // pred_fallthru
      _
    // Predicated region
    $region10: #{tpu_custom_call.1} parent=1 // pred_check
      _
    $region11: #{tpu_custom_call.1} parent=1 // pred_check_branch
      %39 = sbr.rel (0) target = $region13
    $region12: #{tpu_custom_call.1} parent=1 // pred_region
      %s41 = ssub.s32 256, 256
      %42 = vsyncadd [#allocation6], %s41
      %s43 = sshll.u32 [#allocation7], 4
      %s44 = int_to_ptr.vmem [resolvable:$true] %s43
      %49 = dma.hbm_to_vmem [thread:$0]  %s2, 256, %s44, [#allocation6], 64, 64, 4
    $region13: #{tpu_custom_call.1} parent=1 // pred_fallthru
      _
    // Predicated region
    $region14: #{tpu_custom_call.1} parent=1 // pred_check
      _
    $region15: #{tpu_custom_call.1} parent=1 // pred_check_branch
      %51 = sbr.rel (0) target = $region17
    $region16: #{tpu_custom_call.1} parent=1 // pred_region
      %52 = dma.done [#allocation3], 128
    $region17: #{tpu_custom_call.1} parent=1 // pred_fallthru
      _
    // Predicated region
    $region18: #{tpu_custom_call.1} parent=1 // pred_check
      _
    $region19: #{tpu_custom_call.1} parent=1 // pred_check_branch
      %54 = sbr.rel (0) target = $region21
    $region20: #{tpu_custom_call.1} parent=1 // pred_region
      %55 = dma.done [#allocation6], 256
    $region21: #{tpu_custom_call.1} parent=1 // pred_fallthru
      _
    // Predicated region
    $region22: #{tpu_custom_call.1} parent=1 // pred_check
      _
    $region23: #{tpu_custom_call.1} parent=1 // pred_check_branch
      %57 = sbr.rel (0) target = $region25
    $region24: #{tpu_custom_call.1} parent=1 // pred_region
      %58 = dma.done [#allocation6], 256
    $region25: #{tpu_custom_call.1} parent=1 // pred_fallthru
      _
    %v60 = vld [vmem:[#allocation2] sm:$0xf]
    %v61 = vld [vmem:[#allocation2 + $0x4] sm:$0xf]
    %v62 = vld [vmem:[#allocation5] sm:$0xf]
    %v63 = vld [vmem:[#allocation5 + $0x4] sm:$0xf]
    %v64 = vld [vmem:[#allocation5 + $0x8] sm:$0xf]
    %v65 = vld [vmem:[#allocation5 + $0xc] sm:$0xf]
    %v68 = vunpack.c.l.b16 %v60
    %v69 = vunpack.c.l.b16 %v61
    %v70 = vpack.c.b16 %v69, %v68
    %v75 = vunpack.c.l.b16 %v62
    %v76 = vunpack.c.l.b16 %v63
    %v77 = vunpack.c.l.b16 %v64
    %v78 = vunpack.c.l.b16 %v65
    %v79 = vpack.c.b16 %v76, %v75
    %v80 = vpack.c.b16 %v78, %v77
    %vm83 = vcmask 261120
    %v85 = vsel %vm83, %v70, 0
    %87 = vmatprep.subr.bf16.mxu0 0
    %88 = vmatpush1.bf16.msra.mxu0 0
    %89 = vmatprep.subr.bf16.mxu0 0
    %90 = vmatpush1.bf16.msra.mxu0 0
    %91 = vmatprep.subr.bf16.mxu0 0
    %92 = vmatpush1.bf16.msra.mxu0 0
    %93 = vmatprep.subr.bf16.mxu0 0
    %94 = vmatpush1.bf16.msra.mxu0 0
    %95 = vmatprep.subr.bf16.mxu0 0
    %96 = vmatpush1.bf16.msra.mxu0 0
    %97 = vmatprep.subr.bf16.mxu0 0
    %98 = vmatpush1.bf16.msra.mxu0 0
    %99 = vmatprep.subr.bf16.mxu0 0
    %100 = vmatpush1.bf16.msra.mxu0 %v80
    %101 = vmatprep.subr.bf16.mxu0 0
    %102 = vmatpush1.bf16.msra.mxu0 %v79
    %103 = vmatprep.subr.bf16.mxu0 0
    %104 = vmatpush2.bf16.msra.mxu0 0
    %105 = vmatprep.subr.bf16.mxu0 0
    %106 = vmatpush2.bf16.msra.mxu0 0
    %107 = vmatprep.subr.bf16.mxu0 0
    %108 = vmatpush2.bf16.msra.mxu0 0
    %109 = vmatprep.subr.bf16.mxu0 0
    %110 = vmatpush2.bf16.msra.mxu0 0
    %111 = vmatprep.subr.bf16.mxu0 0
    %112 = vmatpush2.bf16.msra.mxu0 0
    %113 = vmatprep.subr.bf16.mxu0 0
    %114 = vmatpush2.bf16.msra.mxu0 0
    %115 = vmatprep.subr.bf16.mxu0 0
    %116 = vmatpush2.bf16.msra.mxu0 0
    %117 = vmatprep.subr.bf16.mxu0 0
    %118 = vmatpush2.bf16.msra.mxu0 0
    %119 = vmatprep.mubr.bf16.mxu0 0
    %120 = vmatmul.mubr.bf16.gmra.mxu0 %v85
    %v121 = vpop.f32.mrf.mxu0
    %v122 = vadd.f32 0.0, %v121
    %v123 = vpop.f32.mrf.mxu0
    %v124 = vpop.f32.mrf.mxu0
    %v125 = vadd.f32 0.0, %v124
    %v126 = vpop.f32.mrf.mxu0
    %127 = vdwg.mxu0
    %v128 = vpack.c.bf16 %v125, %v122
    %v130 = vunpack.c.l.b16 %v128
    %v131 = vunpack.c.h.b16 %v128
    %v132 = vpack.c.b16 %v130, %v130
    %v133 = vpack.c.b16 %v131, %v131
    %vm136 = vcmask 257024
    %137 = vst.msk [vmem:[#allocation8] sm:$0xf] %vm136, %v132
    %138 = vst.msk [vmem:[#allocation8 + $0x4] sm:$0xf] %vm136, %v133
    %v139 = vld [vmem:[#allocation7] sm:$0xf]
    %v140 = vld [vmem:[#allocation7 + $0x4] sm:$0xf]
    %v141 = vld [vmem:[#allocation7 + $0x8] sm:$0xf]
    %v142 = vld [vmem:[#allocation7 + $0xc] sm:$0xf]
    %v147 = vunpack.c.l.b16 %v139
    %v148 = vunpack.c.l.b16 %v140
    %v149 = vunpack.c.l.b16 %v141
    %v150 = vunpack.c.l.b16 %v142
    %v151 = vpack.c.b16 %v148, %v147
    %v152 = vpack.c.b16 %v150, %v149
    %v156 = vsel %vm83, %v128, 0
    %158 = vmatprep.subr.bf16.mxu0 0
    %159 = vmatpush1.bf16.msra.mxu0 0
    %160 = vmatprep.subr.bf16.mxu0 0
    %161 = vmatpush1.bf16.msra.mxu0 0
    %162 = vmatprep.subr.bf16.mxu0 0
    %163 = vmatpush1.bf16.msra.mxu0 0
    %164 = vmatprep.subr.bf16.mxu0 0
    %165 = vmatpush1.bf16.msra.mxu0 0
    %166 = vmatprep.subr.bf16.mxu0 0
    %167 = vmatpush1.bf16.msra.mxu0 0
    %168 = vmatprep.subr.bf16.mxu0 0
    %169 = vmatpush1.bf16.msra.mxu0 0
    %170 = vmatprep.subr.bf16.mxu0 0
    %171 = vmatpush1.bf16.msra.mxu0 %v152
    %172 = vmatprep.subr.bf16.mxu0 0
    %173 = vmatpush1.bf16.msra.mxu0 %v151
    %174 = vmatprep.subr.bf16.mxu0 0
    %175 = vmatpush2.bf16.msra.mxu0 0
    %176 = vmatprep.subr.bf16.mxu0 0
    %177 = vmatpush2.bf16.msra.mxu0 0
    %178 = vmatprep.subr.bf16.mxu0 0
    %179 = vmatpush2.bf16.msra.mxu0 0
    %180 = vmatprep.subr.bf16.mxu0 0
    %181 = vmatpush2.bf16.msra.mxu0 0
    %182 = vmatprep.subr.bf16.mxu0 0
    %183 = vmatpush2.bf16.msra.mxu0 0
    %184 = vmatprep.subr.bf16.mxu0 0
    %185 = vmatpush2.bf16.msra.mxu0 0
    %186 = vmatprep.subr.bf16.mxu0 0
    %187 = vmatpush2.bf16.msra.mxu0 0
    %188 = vmatprep.subr.bf16.mxu0 0
    %189 = vmatpush2.bf16.msra.mxu0 0
    %190 = vmatprep.mubr.bf16.mxu0 0
    %191 = vmatmul.mubr.bf16.gmra.mxu0 %v156
    %v192 = vpop.f32.mrf.mxu0
    %v193 = vadd.f32 0.0, %v192
    %v194 = vpop.f32.mrf.mxu0
    %v195 = vpop.f32.mrf.mxu0
    %v196 = vadd.f32 0.0, %v195
    %v197 = vpop.f32.mrf.mxu0
    %198 = vdwg.mxu0
    %199 = vst [vmem:[#allocation9] sm:$0xff] %v193
    %200 = vst [vmem:[#allocation9 + $0x8] sm:$0xff] %v196
    // Predicated region
    $region26: #{tpu_custom_call.1} parent=1 // pred_check
      _
    $region27: #{tpu_custom_call.1} parent=1 // pred_check_branch
      %202 = sbr.rel (0) target = $region29
    $region28: #{tpu_custom_call.1} parent=1 // pred_region
      %s204 = ssub.s32 128, 128
      %205 = vsyncadd [#allocation4], %s204
      %s206 = sshll.u32 [#allocation8], 4
      %s207 = int_to_ptr.vmem [resolvable:$true] %s206
      %212 = dma.vmem_to_hbm [thread:$0]  %s207, 128, %s3, [#allocation4], 64, 64, 4
    $region29: #{tpu_custom_call.1} parent=1 // pred_fallthru
      _
    // Predicated region
    $region30: #{tpu_custom_call.1} parent=1 // pred_check
      _
    $region31: #{tpu_custom_call.1} parent=1 // pred_check_branch
      %214 = sbr.rel (0) target = $region33
    $region32: #{tpu_custom_call.1} parent=1 // pred_region
      %s216 = ssub.s32 256, 256
      %217 = vsyncadd [#allocation10], %s216
      %s218 = sshll.u32 [#allocation9], 4
      %s219 = int_to_ptr.vmem [resolvable:$true] %s218
      %224 = dma.vmem_to_hbm [thread:$0]  %s219, 256, %s4, [#allocation10], 128, 128, 8
    $region33: #{tpu_custom_call.1} parent=1 // pred_fallthru
      _
    // Predicated region
    $region34: #{tpu_custom_call.1} parent=1 // pred_check
      _
    $region35: #{tpu_custom_call.1} parent=1 // pred_check_branch
      %226 = sbr.rel (0) target = $region37
    $region36: #{tpu_custom_call.1} parent=1 // pred_region
      %227 = dma.done [#allocation4], 128
    $region37: #{tpu_custom_call.1} parent=1 // pred_fallthru
      _
    // Predicated region
    $region38: #{tpu_custom_call.1} parent=1 // pred_check
      _
    $region39: #{tpu_custom_call.1} parent=1 // pred_check_branch
      %229 = sbr.rel (0) target = $region41
    $region40: #{tpu_custom_call.1} parent=1 // pred_region
      %230 = dma.done [#allocation10], 256
    $region41: #{tpu_custom_call.1} parent=1 // pred_fallthru
      _
    %231 = vsyncpa [#allocation3], 1
    %232 = vsyncpa [#allocation6], 1
    %233 = vsyncpa [#allocation4], 1
    %234 = vsyncpa [#allocation10], 1

</llo_original>
